<compile_context>
chip_gen: v7x
topology: tpu7x:2x2x1
jax: 0.10.0
libtpu: 0.0.40
codegen_flags: <defaults>
</compile_context>

<pallas_src>
import functools

import jax
import jax.numpy as jnp
from jax.experimental import pallas as pl
from jax.experimental.pallas import tpu as pltpu


def _round_up(x, m):
    return (x + m - 1) // m * m


def repr_kernel(ids_ref, table_ref, w_ref, b_ref, scale_ref, shift_ref,
                fw_ref, fb_ref, out_ref, gbuf, sem, *, d, feat):
    # ids_ref   : (N_pad,)  int32  SMEM (scalar prefetch) - all token ids
    # table_ref : (V, Dp)   f32    HBM (pl.ANY)  [vectors | freq | 0-pad]
    # w_ref     : (Dp, Fp)  bf16   inner Linear weight (zero-padded)
    # b_ref     : (1, Fp)   f32    inner Linear bias (zero-padded)
    # scale/shift_ref : (1, Fp) f32  folded BatchNorm1d eval affine (zero-padded)
    # fw_ref/fb_ref   : (1, 1)  f32  freq_act Linear(1,1) scalars (SMEM)
    # out_ref   : (TN, Fp)  f32    lane-dense fused output tile
    # gbuf      : (TN, Dp)  f32    VMEM gather buffer (scratch)
    # sem       : (1,)      DMA semaphore (scratch)
    blk, dp = gbuf.shape
    fp = out_ref.shape[1]
    base = pl.program_id(0) * blk

    # ---- row gather: one async DMA per token, table stays in HBM ----
    # TODO(synk): for very large TN, double-buffer the gather across grid steps.
    def start_row(r, carry):
        tok = ids_ref[base + r]
        pltpu.make_async_copy(
            table_ref.at[pl.ds(tok, 1), :],
            gbuf.at[pl.ds(r, 1), :],
            sem.at[0]).start()
        return carry

    jax.lax.fori_loop(0, blk, start_row, 0)

    def wait_row(r, carry):
        pltpu.make_async_copy(
            table_ref.at[pl.ds(0, 1), :],
            gbuf.at[pl.ds(r, 1), :],
            sem.at[0]).wait()
        return carry

    jax.lax.fori_loop(0, blk, wait_row, 0)

    x = gbuf[...]                                   # (TN, Dp) f32  [emb | freq | 0]
    freq = x[:, d:d + 1]                            # (TN, 1)  f32 (exact, kept in f32)

    # ---- inner Linear on the MXU: bf16 operands, f32 accumulation ----
    z = jnp.dot(x.astype(jnp.bfloat16), w_ref[...],
                preferred_element_type=jnp.float32) + b_ref[...]   # (TN, Fp)

    # ---- GELU, exact erf form (PyTorch nn.GELU default) ----
    g = 0.5 * z * (1.0 + jax.lax.erf(z * jnp.float32(0.7071067811865476)))

    # ---- BatchNorm1d eval (folded affine); padded columns have scale=shift=0 ----
    body = g * scale_ref[...] + shift_ref[...]                      # (TN, Fp)

    # ---- freq_act = Tanh(Linear(1,1)(freq)) merged into output column `feat` ----
    fout = jnp.tanh(freq * fw_ref[0, 0] + fb_ref[0, 0])             # (TN, 1)

    col = jax.lax.broadcasted_iota(jnp.int32, (blk, fp), 1)
    out_ref[...] = jnp.where(col == feat, fout, body)               # one lane-dense store


def repr_forward(token_ids, vectors, freq_table, params, *, tn=256, eps=1e-5):
    """Repr.forward with add_frequencies_input=True, add_frequencies=True (eval mode)."""
    f32 = jnp.float32
    n = int(token_ids.shape[0])
    v, d = int(vectors.shape[0]), int(vectors.shape[1])
    w = params["w"].astype(f32)                    # (D+1, F), rows: [embedding | freq]
    feat = int(w.shape[1])

    dp = _round_up(d + 1, 128)                     # lane-dense gather width
    fp = _round_up(feat + 1, 128)                  # lane-dense output width

    # ---- param prep (cheap, cacheable) ----
    # frequency table folded into the embedding table as column d
    table = jnp.zeros((v, dp), f32)
    table = table.at[:, :d].set(vectors.astype(f32))
    table = table.at[:, d:d + 1].set(freq_table.astype(f32))

    w_pad = jnp.zeros((dp, fp), f32).at[:d + 1, :feat].set(w).astype(jnp.bfloat16)
    b_pad = jnp.zeros((1, fp), f32).at[:, :feat].set(params["b"].astype(f32))
    scale = params["gamma"].astype(f32) * jax.lax.rsqrt(params["var"].astype(f32) + f32(eps))
    shift = params["beta"].astype(f32) - params["mean"].astype(f32) * scale
    scale_pad = jnp.zeros((1, fp), f32).at[:, :feat].set(scale)
    shift_pad = jnp.zeros((1, fp), f32).at[:, :feat].set(shift)

    # ---- token-row tiling: multiples of 8; >=2 grid steps when n > 8 (megacore) ----
    if n <= 8:
        blk_n = 8
    else:
        blk_n = min(tn, _round_up(-(-n // 2), 8))
    grid_n = -(-n // blk_n)
    n_pad = grid_n * blk_n

    ids = jnp.clip(token_ids.astype(jnp.int32), 0, v - 1)
    ids = jnp.pad(ids, (0, n_pad - n))             # pad rows gather token 0; sliced off

    cost = pl.CostEstimate(
        flops=2 * n_pad * dp * fp + 8 * n_pad * fp,
        transcendentals=n_pad * (fp + 1),
        bytes_accessed=4 * n_pad * (dp + fp + 1) + 2 * dp * fp + 12 * fp,
    )

    kernel = functools.partial(repr_kernel, d=d, feat=feat)

    out = pl.pallas_call(
        kernel,
        grid_spec=pltpu.PrefetchScalarGridSpec(
            num_scalar_prefetch=1,
            grid=(grid_n,),
            in_specs=[
                pl.BlockSpec(memory_space=pl.ANY),                   # table (stays in HBM)
                pl.BlockSpec((dp, fp), lambda i, ids: (0, 0)),       # w (bf16)
                pl.BlockSpec((1, fp), lambda i, ids: (0, 0)),        # bias
                pl.BlockSpec((1, fp), lambda i, ids: (0, 0)),        # BN scale (folded)
                pl.BlockSpec((1, fp), lambda i, ids: (0, 0)),        # BN shift (folded)
                pl.BlockSpec(memory_space=pltpu.MemorySpace.SMEM),   # fw scalar
                pl.BlockSpec(memory_space=pltpu.MemorySpace.SMEM),   # fb scalar
            ],
            out_specs=pl.BlockSpec((blk_n, fp), lambda i, ids: (i, 0)),
            scratch_shapes=[
                pltpu.VMEM((blk_n, dp), f32),                        # gather buffer
                pltpu.SemaphoreType.DMA((1,)),                       # gather semaphore
            ],
        ),
        out_shape=jax.ShapeDtypeStruct((n_pad, fp), f32),
        compiler_params=pltpu.CompilerParams(
            dimension_semantics=("parallel",),
            vmem_limit_bytes=32 * 1024 * 1024,
        ),
        cost_estimate=cost,
    )(
        ids, table, w_pad, b_pad, scale_pad, shift_pad,
        params["fw"].astype(f32), params["fb"].astype(f32),
    )
    return out[:n, :feat + 1]                                        # (N, F+1)


def _reference(token_ids, vectors, freq_table, params):
    """Pure-JAX reference of the same forward pass (correctness check)."""
    f32 = jnp.float32
    emb = jnp.take(vectors, token_ids, axis=0).astype(f32)
    freq = jnp.take(freq_table, token_ids, axis=0).astype(f32)
    x = jnp.concatenate([emb, freq], axis=1)
    z = jnp.dot(x, params["w"], precision="highest") + params["b"]
    g = 0.5 * z * (1.0 + jax.lax.erf(z / jnp.sqrt(f32(2.0))))
    h = (g - params["mean"]) * jax.lax.rsqrt(params["var"] + f32(1e-5)) \
        * params["gamma"] + params["beta"]
    fout = jnp.tanh(freq * params["fw"][0, 0] + params["fb"][0, 0])
    return jnp.concatenate([h, fout], axis=1)


if __name__ == "__main__":
    key = jax.random.PRNGKey(0)
    k_vec, k_freq, k_w, k_b, k_g, k_be, k_m, k_v, k_fw, k_fb, k_tok = \
        jax.random.split(key, 11)

    V = 64          # vocab size
    D = 32          # embedding dim (vectors.vectors.shape[1])
    F = 16          # feature_size
    N = 8           # number of tokens in the batch
    Din = D + 1     # add_frequencies_input=True

    vectors = jax.random.normal(k_vec, (V, D), dtype=jnp.float32)
    freq_table = jax.nn.sigmoid(
        jax.random.normal(k_freq, (V, 1), dtype=jnp.float32))  # synthetic word-frequency embedding

    params = {
        # inner Linear (PyTorch weight is (F, Din); stored pre-transposed as (Din, F))
        "w": jax.random.normal(k_w, (Din, F), dtype=jnp.float32) * 0.1,
        "b": jax.random.normal(k_b, (1, F), dtype=jnp.float32) * 0.1,
        # BatchNorm1d(F) eval-mode parameters / running stats
        "gamma": 1.0 + 0.1 * jax.random.normal(k_g, (1, F), dtype=jnp.float32),
        "beta": 0.1 * jax.random.normal(k_be, (1, F), dtype=jnp.float32),
        "mean": 0.1 * jax.random.normal(k_m, (1, F), dtype=jnp.float32),
        "var": 1.0 + 0.1 * jax.nn.softplus(
            jax.random.normal(k_v, (1, F), dtype=jnp.float32)),
        # freq_act Linear(1, 1)
        "fw": jax.random.normal(k_fw, (1, 1), dtype=jnp.float32),
        "fb": jax.random.normal(k_fb, (1, 1), dtype=jnp.float32),
    }

    token_ids = jax.random.randint(k_tok, (N,), 0, V)

    out = repr_forward(token_ids, vectors, freq_table, params)
    out = jax.block_until_ready(out)
    assert out.shape == (N, F + 1), out.shape

    ref = jax.block_until_ready(_reference(token_ids, vectors, freq_table, params))
    # bf16 MXU operands with f32 accumulation -> slightly looser tolerance than pure f32
    assert jnp.allclose(out, ref, atol=2e-2, rtol=2e-2), \
        float(jnp.max(jnp.abs(out - ref)))

    print("KERNEL_OK")
</pallas_src>

<mosaic_0001>
module attributes {stable_mosaic.version = 11 : i64} {
  func.func @repr_kernel(%arg0: i32, %arg1: memref<8xi32, #tpu.memory_space<smem>>, %arg2: memref<64x128xf32, #tpu.memory_space<any>>, %arg3: memref<128x128xbf16, #tpu.memory_space<vmem>>, %arg4: memref<1x128xf32, #tpu.memory_space<vmem>>, %arg5: memref<1x128xf32, #tpu.memory_space<vmem>>, %arg6: memref<1x128xf32, #tpu.memory_space<vmem>>, %arg7: memref<1x1xf32, #tpu.memory_space<smem>>, %arg8: memref<1x1xf32, #tpu.memory_space<smem>>, %arg9: memref<8x128xf32, #tpu.memory_space<vmem>>, %arg10: memref<8x128xf32, #tpu.memory_space<vmem>>, %arg11: memref<1x!tpu.dma_semaphore, #tpu.memory_space<semaphore_mem>>) attributes {dimension_semantics = [#tpu.dimension_semantics<parallel>], iteration_bounds = array<i64: 1>, scalar_prefetch = 1 : i64, scratch_operands = 2 : i64, tpu.core_type = #tpu.core_type<tc>, window_params = [{}, {pipeline_mode = #tpu.pipeline_mode<synchronous>, transform_indices = @transform_1, window_bounds = array<i64: 128, 128>}, {pipeline_mode = #tpu.pipeline_mode<synchronous>, transform_indices = @transform_2, window_bounds = array<i64: 1, 128>}, {pipeline_mode = #tpu.pipeline_mode<synchronous>, transform_indices = @transform_3, window_bounds = array<i64: 1, 128>}, {pipeline_mode = #tpu.pipeline_mode<synchronous>, transform_indices = @transform_4, window_bounds = array<i64: 1, 128>}, {transform_indices = @transform_5, window_bounds = array<i64: 1, 1>}, {transform_indices = @transform_6, window_bounds = array<i64: 1, 1>}, {transform_indices = @transform_7, window_bounds = array<i64: 8, 128>}]} {
    %c8_i32 = arith.constant 8 : i32
    %0 = arith.muli %arg0, %c8_i32 : i32
    %c0_i32 = arith.constant 0 : i32
    %c8_i32_0 = arith.constant 8 : i32
    %1 = arith.addi %c0_i32, %c8_i32_0 : i32
    %c1_i32 = arith.constant 1 : i32
    scf.for %arg12 = %c0_i32 to %1 step %c1_i32  : i32 {
      %39 = arith.addi %0, %arg12 : i32
      %40 = arith.index_cast %39 : i32 to index
      %41 = memref.load %arg1[%40] : memref<8xi32, #tpu.memory_space<smem>>
      %c0_i32_24 = arith.constant 0 : i32
      %c0_i32_25 = arith.constant 0 : i32
      %42 = tpu.memref_slice %arg2[%41, %c0_i32_25] : memref<64x128xf32, #tpu.memory_space<any>> -> memref<1x128xf32, #tpu.memory_space<any>>
      %c0_i32_26 = arith.constant 0 : i32
      %43 = tpu.memref_slice %arg10[%arg12, %c0_i32_26] : memref<8x128xf32, #tpu.memory_space<vmem>> -> memref<1x128xf32, #tpu.memory_space<vmem>>
      %44 = tpu.memref_slice %arg11[%c0_i32_24] : memref<1x!tpu.dma_semaphore, #tpu.memory_space<semaphore_mem>> -> memref<1x!tpu.dma_semaphore, #tpu.memory_space<semaphore_mem>>
      %45 = tpu.memref_squeeze %44 : memref<1x!tpu.dma_semaphore, #tpu.memory_space<semaphore_mem>> -> memref<!tpu.dma_semaphore, #tpu.memory_space<semaphore_mem>>
      tpu.enqueue_dma source(%42 : memref<1x128xf32, #tpu.memory_space<any>>) target(%43 : memref<1x128xf32, #tpu.memory_space<vmem>>) target_semaphore(%45 : memref<!tpu.dma_semaphore, #tpu.memory_space<semaphore_mem>>)
    }
    %c8_i32_1 = arith.constant 8 : i32
    %c0_i32_2 = arith.constant 0 : i32
    %c8_i32_3 = arith.constant 8 : i32
    %2 = arith.addi %c0_i32_2, %c8_i32_3 : i32
    %c1_i32_4 = arith.constant 1 : i32
    scf.for %arg12 = %c0_i32_2 to %2 step %c1_i32_4  : i32 {
      %c0_i32_24 = arith.constant 0 : i32
      %c0_i32_25 = arith.constant 0 : i32
      %c0_i32_26 = arith.constant 0 : i32
      %39 = tpu.memref_slice %arg2[%c0_i32_25, %c0_i32_26] : memref<64x128xf32, #tpu.memory_space<any>> -> memref<1x128xf32, #tpu.memory_space<any>>
      %c0_i32_27 = arith.constant 0 : i32
      %40 = tpu.memref_slice %arg10[%arg12, %c0_i32_27] : memref<8x128xf32, #tpu.memory_space<vmem>> -> memref<1x128xf32, #tpu.memory_space<vmem>>
      %41 = tpu.memref_slice %arg11[%c0_i32_24] : memref<1x!tpu.dma_semaphore, #tpu.memory_space<semaphore_mem>> -> memref<1x!tpu.dma_semaphore, #tpu.memory_space<semaphore_mem>>
      %42 = tpu.memref_squeeze %41 : memref<1x!tpu.dma_semaphore, #tpu.memory_space<semaphore_mem>> -> memref<!tpu.dma_semaphore, #tpu.memory_space<semaphore_mem>>
      tpu.wait_dma2 semaphore(%42 : memref<!tpu.dma_semaphore, #tpu.memory_space<semaphore_mem>>) src(%39 : memref<1x128xf32, #tpu.memory_space<any>>) dst(%40 : memref<1x128xf32, #tpu.memory_space<vmem>>)
    }
    %c8_i32_5 = arith.constant 8 : i32
    %c0 = arith.constant 0 : index
    %c0_6 = arith.constant 0 : index
    %3 = vector.load %arg10[%c0, %c0_6] : memref<8x128xf32, #tpu.memory_space<vmem>>, vector<8x128xf32>
    %4 = vector.extract_strided_slice %3 {offsets = [0, 32], sizes = [8, 1], strides = [1, 1]} : vector<8x128xf32> to vector<8x1xf32>
    %5 = arith.truncf %3 : vector<8x128xf32> to vector<8x128xbf16>
    %c0_7 = arith.constant 0 : index
    %c0_8 = arith.constant 0 : index
    %6 = vector.load %arg3[%c0_7, %c0_8] : memref<128x128xbf16, #tpu.memory_space<vmem>>, vector<128x128xbf16>
    %cst = arith.constant dense<0.000000e+00> : vector<8x128xf32>
    %7 = tpu.matmul %5, %6, %cst {dimension_numbers = #tpu.dot_dimension_numbers<[1], [0], [0], [1], [0, 0, 1, 1], [], []>} : vector<8x128xbf16>, vector<128x128xbf16>, vector<8x128xf32> -> vector<8x128xf32>
    %c0_9 = arith.constant 0 : index
    %c0_10 = arith.constant 0 : index
    %8 = vector.load %arg4[%c0_9, %c0_10] : memref<1x128xf32, #tpu.memory_space<vmem>>, vector<1x128xf32>
    %9 = vector.broadcast %8 : vector<1x128xf32> to vector<8x128xf32>
    %10 = arith.addf %7, %9 : vector<8x128xf32>
    %cst_11 = arith.constant 5.000000e-01 : f32
    %11 = vector.broadcast %cst_11 : f32 to vector<8x128xf32>
    %12 = arith.mulf %11, %10 : vector<8x128xf32>
    %cst_12 = arith.constant 0.707106769 : f32
    %13 = vector.broadcast %cst_12 : f32 to vector<8x128xf32>
    %14 = arith.mulf %10, %13 : vector<8x128xf32>
    %15 = math.erf %14 : vector<8x128xf32>
    %cst_13 = arith.constant 1.000000e+00 : f32
    %16 = vector.broadcast %cst_13 : f32 to vector<8x128xf32>
    %17 = arith.addf %16, %15 : vector<8x128xf32>
    %18 = arith.mulf %12, %17 : vector<8x128xf32>
    %c0_14 = arith.constant 0 : index
    %c0_15 = arith.constant 0 : index
    %19 = vector.load %arg5[%c0_14, %c0_15] : memref<1x128xf32, #tpu.memory_space<vmem>>, vector<1x128xf32>
    %20 = vector.broadcast %19 : vector<1x128xf32> to vector<8x128xf32>
    %21 = arith.mulf %18, %20 : vector<8x128xf32>
    %c0_16 = arith.constant 0 : index
    %c0_17 = arith.constant 0 : index
    %22 = vector.load %arg6[%c0_16, %c0_17] : memref<1x128xf32, #tpu.memory_space<vmem>>, vector<1x128xf32>
    %23 = vector.broadcast %22 : vector<1x128xf32> to vector<8x128xf32>
    %24 = arith.addf %21, %23 : vector<8x128xf32>
    %c0_18 = arith.constant 0 : index
    %c0_19 = arith.constant 0 : index
    %25 = memref.load %arg7[%c0_18, %c0_19] : memref<1x1xf32, #tpu.memory_space<smem>>
    %26 = vector.broadcast %25 : f32 to vector<8x1xf32>
    %27 = arith.mulf %4, %26 : vector<8x1xf32>
    %c0_20 = arith.constant 0 : index
    %c0_21 = arith.constant 0 : index
    %28 = memref.load %arg8[%c0_20, %c0_21] : memref<1x1xf32, #tpu.memory_space<smem>>
    %29 = vector.broadcast %28 : f32 to vector<8x1xf32>
    %30 = arith.addf %27, %29 : vector<8x1xf32>
    %31 = math.tanh %30 : vector<8x1xf32>
    %32 = tpu.iota {dimensions = array<i32: 1>} : vector<8x128xi32>
    %c16_i32 = arith.constant 16 : i32
    %33 = vector.broadcast %c16_i32 : i32 to vector<8x128xi32>
    %34 = arith.cmpi eq, %32, %33 : vector<8x128xi32>
    %35 = vector.shape_cast %31 : vector<8x1xf32> to vector<8x1xf32>
    %36 = vector.broadcast %35 : vector<8x1xf32> to vector<8x128xf32>
    %37 = arith.select %34, %36, %24 : vector<8x128xi1>, vector<8x128xf32>
    %c0_22 = arith.constant 0 : index
    %c0_23 = arith.constant 0 : index
    %38 = vector.load %arg9[%c0_22, %c0_23] : memref<8x128xf32, #tpu.memory_space<vmem>>, vector<8x128xf32>
    tpu.vector_store %arg9[%c0_22, %c0_23], %37 {strides = array<i32>} : memref<8x128xf32, #tpu.memory_space<vmem>>, vector<8x128xf32>,
    return
  }
  func.func @transform_1(%arg0: i32, %arg1: memref<8xi32, #tpu.memory_space<smem>>) -> (i32, i32) {
    %c0_i32 = arith.constant 0 : i32
    %c0_i32_0 = arith.constant 0 : i32
    %c0_i32_1 = arith.constant 0 : i32
    return %c0_i32, %c0_i32_0 : i32, i32
  }
  func.func @transform_2(%arg0: i32, %arg1: memref<8xi32, #tpu.memory_space<smem>>) -> (i32, i32) {
    %c0_i32 = arith.constant 0 : i32
    %c0_i32_0 = arith.constant 0 : i32
    %c0_i32_1 = arith.constant 0 : i32
    return %c0_i32, %c0_i32_0 : i32, i32
  }
  func.func @transform_3(%arg0: i32, %arg1: memref<8xi32, #tpu.memory_space<smem>>) -> (i32, i32) {
    %c0_i32 = arith.constant 0 : i32
    %c0_i32_0 = arith.constant 0 : i32
    %c0_i32_1 = arith.constant 0 : i32
    return %c0_i32, %c0_i32_0 : i32, i32
  }
  func.func @transform_4(%arg0: i32, %arg1: memref<8xi32, #tpu.memory_space<smem>>) -> (i32, i32) {
    %c0_i32 = arith.constant 0 : i32
    %c0_i32_0 = arith.constant 0 : i32
    %c0_i32_1 = arith.constant 0 : i32
    return %c0_i32, %c0_i32_0 : i32, i32
  }
  func.func @transform_5(%arg0: i32, %arg1: memref<8xi32, #tpu.memory_space<smem>>) -> (i32, i32) {
    %c0_i32 = arith.constant 0 : i32
    %c0_i32_0 = arith.constant 0 : i32
    %c0_i32_1 = arith.constant 0 : i32
    return %c0_i32, %c0_i32_0 : i32, i32
  }
  func.func @transform_6(%arg0: i32, %arg1: memref<8xi32, #tpu.memory_space<smem>>) -> (i32, i32) {
    %c0_i32 = arith.constant 0 : i32
    %c0_i32_0 = arith.constant 0 : i32
    %c0_i32_1 = arith.constant 0 : i32
    return %c0_i32, %c0_i32_0 : i32, i32
  }
  func.func @transform_7(%arg0: i32, %arg1: memref<8xi32, #tpu.memory_space<smem>>) -> (i32, i32) {
    %c0_i32 = arith.constant 0 : i32
    %c0_i32_0 = arith.constant 0 : i32
    return %arg0, %c0_i32 : i32, i32
  }
}

</mosaic_0001>

<llo_original>
// kernel: tpu_custom_call.1
$region0: #{tpu_custom_call.1}
  #allocation0 [shape = 'u32[]', space=smem, size = 0x4, offset = 0x4, fixed_abs, tag = 'smem constant byte address 0x4 - core index']
  #allocation1 [shape = 'u32[144,128]{1,0:T(1,128)}', space=vmem, size = 0x12000, scoped, tag = 'internal scratch']
  #allocation2 [shape = 'f32[8,128]{1,0:T(8,128)}', space=vmem, size = 0x1000, scoped, tag = 'scratch operand']
  #allocation3 [shape = 's32[1]{0}', space=sflag, size = 0x4, scoped, tag = 'scratch operand']
  #allocation4 [shape = 's32[1]{0}', space=sflag, size = 0x4, scoped, tag = 'scoped memory for tpu_custom_call.1']
  #allocation5 [shape = 'u8[512]{0}', space=smem, size = 0x200, scoped, tag = 'prefetched SMEM operand 0']
  #allocation6 [shape = 'f32[1,1]{1,0:T(1,128)S(6)}', space=smem, size = 0x200, scoped, tag = 'scoped memory for tpu_custom_call.1']
  #allocation7 [shape = 'f32[1,1]{1,0:T(1,128)S(6)}', space=smem, size = 0x200, scoped, tag = 'scoped memory for tpu_custom_call.1']
  #allocation12 [shape = 's32[]', space=sflag, size = 0x4, offset = 0, fixed_abs, tag = 'sflag constant byte address 0x0 - dummy sync flag']
  #allocation13 [shape = 's32[]', space=sflag, size = 0x4, offset = 0, fixed_abs, tag = 'sflag constant byte address 0x0 - dummy sync flag']
  #allocation14 [shape = 'u32[]', space=smem, size = 0x4, offset = 0x44, fixed_abs, tag = 'smem constant byte address 0x44 - assertion arg 0']
  #allocation15 [shape = 'u32[]', space=smem, size = 0x4, offset = 0x48, fixed_abs, tag = 'smem constant byte address 0x48 - assertion arg 1']
  %s0 = inlined_call_operand.vmem [shape: s32[8], index: 0, kind: input, shape index: {}]
  %s1 = inlined_call_operand.hbm [shape: f32[64,128], index: 1, kind: input, shape index: {}]
  %s2 = inlined_call_operand.hbm [shape: bf16[128,128], index: 2, kind: input, shape index: {}]
  %s3 = inlined_call_operand.vmem [shape: f32[1,128], index: 3, kind: input, shape index: {}]
  %s4 = inlined_call_operand.vmem [shape: f32[1,128], index: 4, kind: input, shape index: {}]
  %s5 = inlined_call_operand.vmem [shape: f32[1,128], index: 5, kind: input, shape index: {}]
  %s6 = inlined_call_operand.<no memory space> [shape: f32[1,1], index: 6, kind: input, shape index: {}]
  %s7 = inlined_call_operand.<no memory space> [shape: f32[1,1], index: 7, kind: input, shape index: {}]
  %s8 = inlined_call_operand.hbm [shape: f32[8,128], index: 8, kind: output, shape index: {}]
  %s9 = sld [smem:[#allocation0]]
  $region56: #{tpu_custom_call.1} parent=0
    _
  %s11 = ssub.s32 1, %s9
  %s12 = scalar_select 0, %s11, %s9
  %s13 = sshll.u32 %s0, 4
  %s14 = int_to_ptr.vmem [resolvable:$true] %s13
  %16 = dma.vmem_to_smem %s14, 16, [#allocation5], [#allocation4]
  %17 = sst [smem:[#allocation6]] %s6
  %18 = sst [smem:[#allocation7]] %s7
  %19 = dma.done [#allocation4], 16
  %20 = sfence
  $region1: #{tpu_custom_call.1} parent=0
    #allocation8 [shape = 'u8[32768]{0}', space=vmem, size = 0x8000, scoped, tag = 'input window, operand 2, single buffered']
    #allocation9 [shape = 's32[1]{0}', space=sflag, size = 0x4, scoped, tag = 'scoped memory for tpu_custom_call.1']
    #allocation10 [shape = 's32[1]{0}', space=sflag, size = 0x4, scoped, tag = 'scoped memory for tpu_custom_call.1']
    #allocation11 [shape = 'u8[4096]{0}', space=vmem, size = 0x1000, scoped, tag = 'output window, operand 0, single buffered']
    %21 = vsyncpa [#allocation9], 0
    %22 = vsyncpa [#allocation10], 0
    // Predicated region
    $region2: #{tpu_custom_call.1} parent=1 // pred_check
      _
    $region3: #{tpu_custom_call.1} parent=1 // pred_check_branch
      %24 = sbr.rel (0) target = $region5
    $region4: #{tpu_custom_call.1} parent=1 // pred_region
      %s26 = ssub.s32 1024, 1024
      %27 = vsyncadd [#allocation9], %s26
      %s28 = sshll.u32 [#allocation8], 4
      %s29 = int_to_ptr.vmem [resolvable:$true] %s28
      %34 = dma.hbm_to_vmem [thread:$0]  %s2, 1024, %s29, [#allocation9], 64, 64, 4
    $region5: #{tpu_custom_call.1} parent=1 // pred_fallthru
      _
    // Predicated region
    $region6: #{tpu_custom_call.1} parent=1 // pred_check
      _
    $region7: #{tpu_custom_call.1} parent=1 // pred_check_branch
      %36 = sbr.rel (0) target = $region9
    $region8: #{tpu_custom_call.1} parent=1 // pred_region
      _
    $region9: #{tpu_custom_call.1} parent=1 // pred_fallthru
      _
    // Predicated region
    $region10: #{tpu_custom_call.1} parent=1 // pred_check
      _
    $region11: #{tpu_custom_call.1} parent=1 // pred_check_branch
      %38 = sbr.rel (0) target = $region13
    $region12: #{tpu_custom_call.1} parent=1 // pred_region
      _
    $region13: #{tpu_custom_call.1} parent=1 // pred_fallthru
      _
    // Predicated region
    $region14: #{tpu_custom_call.1} parent=1 // pred_check
      _
    $region15: #{tpu_custom_call.1} parent=1 // pred_check_branch
      %40 = sbr.rel (0) target = $region17
    $region16: #{tpu_custom_call.1} parent=1 // pred_region
      _
    $region17: #{tpu_custom_call.1} parent=1 // pred_fallthru
      _
    // Predicated region
    $region18: #{tpu_custom_call.1} parent=1 // pred_check
      _
    $region19: #{tpu_custom_call.1} parent=1 // pred_check_branch
      %42 = sbr.rel (0) target = $region21
    $region20: #{tpu_custom_call.1} parent=1 // pred_region
      _
    $region21: #{tpu_custom_call.1} parent=1 // pred_fallthru
      _
    // Predicated region
    $region22: #{tpu_custom_call.1} parent=1 // pred_check
      _
    $region23: #{tpu_custom_call.1} parent=1 // pred_check_branch
      %44 = sbr.rel (0) target = $region25
    $region24: #{tpu_custom_call.1} parent=1 // pred_region
      _
    $region25: #{tpu_custom_call.1} parent=1 // pred_fallthru
      _
    // Predicated region
    $region26: #{tpu_custom_call.1} parent=1 // pred_check
      _
    $region27: #{tpu_custom_call.1} parent=1 // pred_check_branch
      %46 = sbr.rel (0) target = $region29
    $region28: #{tpu_custom_call.1} parent=1 // pred_region
      %47 = dma.done [#allocation9], 1024
    $region29: #{tpu_custom_call.1} parent=1 // pred_fallthru
      _
    %s49 = smul.u32 0, 8
    loop: start=0, step=1, limit=8
    $region30: #{tpu_custom_call.1} parent=1 // loop_pre_header
      _
    $region31: #{tpu_custom_call.1} parent=1 // loop_header
      %s51 = sphi 0, %s55
      %p52 = scmp.ge.s32.totalorder %s51, 8
    $region32: #{tpu_custom_call.1} parent=1 // loop_header_branch
      %54 = sbr.rel (%p52) target = $region36
    $region33: #{tpu_custom_call.1} parent=1 // loop_body
      %s56 = sadd.s32 %s49, %s51
      %s57 = sld [smem:[#allocation5 + %s56]]
      %s58 = smul.addr %s57, 16
      %s59 = scalar_lea.hbm %s1, %s58
      %s60 = scalar_lea.vmem [#allocation2], %s51
      // Predicated region
      $region37: #{tpu_custom_call.1} parent=33 // pred_check
        _
      $region38: #{tpu_custom_call.1} parent=33 // pred_check_branch
        %62 = sbr.rel target = $region40
      $region39: #{tpu_custom_call.1} parent=33 // pred_region
        %63 = sst [smem:[#allocation14]] [#allocation13]
        %64 = sst [smem:[#allocation15]] [#allocation12]
      $region40: #{tpu_custom_call.1} parent=33 // pred_fallthru
        _
      %66 = shalt.err (0)
      %s68 = sshll.u32 %s60, 4
      %s69 = int_to_ptr.vmem [resolvable:$true] %s68
      %71 = dma.hbm_to_vmem [thread:$0]  %s59, 16, %s69, [#allocation3]
    $region34: #{tpu_custom_call.1} parent=1 // loop_footer
      %s55 = sadd.s32 1, %s51
    $region35: #{tpu_custom_call.1} parent=1 // loop_footer_branch
      %50 = sbr.rel target = $region31
    $region36: #{tpu_custom_call.1} parent=1 // loop_exit
      _
    loop: start=0, step=1, limit=8
    $region41: #{tpu_custom_call.1} parent=1 // loop_pre_header
      _
    $region42: #{tpu_custom_call.1} parent=1 // loop_header
      %s73 = sphi 0, %s77
      %p74 = scmp.ge.s32.totalorder %s73, 8
    $region43: #{tpu_custom_call.1} parent=1 // loop_header_branch
      %76 = sbr.rel (%p74) target = $region47
    $region44: #{tpu_custom_call.1} parent=1 // loop_body
      %s78 = smul.u32 1, 1
      %s79 = sshll.u32 %s78, 4
      %80 = dma.done [#allocation3], %s79
    $region45: #{tpu_custom_call.1} parent=1 // loop_footer
      %s77 = sadd.s32 1, %s73
    $region46: #{tpu_custom_call.1} parent=1 // loop_footer_branch
      %72 = sbr.rel target = $region42
    $region47: #{tpu_custom_call.1} parent=1 // loop_exit
      _
    %v81 = vld [vmem:[#allocation2] sm:$0xff]
    %v82 = vpack.c.bf16 %v81, %v81
    %v83 = vld [vmem:[#allocation8] sm:$0xf]
    %v84 = vld [vmem:[#allocation8 + $0x4] sm:$0xf]
    %v85 = vld [vmem:[#allocation8 + $0x8] sm:$0xf]
    %v86 = vld [vmem:[#allocation8 + $0xc] sm:$0xf]
    %v87 = vld [vmem:[#allocation8 + $0x10] sm:$0xf]
    %v88 = vld [vmem:[#allocation8 + $0x14] sm:$0xf]
    %v89 = vld [vmem:[#allocation8 + $0x18] sm:$0xf]
    %v90 = vld [vmem:[#allocation8 + $0x1c] sm:$0xf]
    %v91 = vld [vmem:[#allocation8 + $0x20] sm:$0xf]
    %v92 = vld [vmem:[#allocation8 + $0x24] sm:$0xf]
    %v93 = vld [vmem:[#allocation8 + $0x28] sm:$0xf]
    %v94 = vld [vmem:[#allocation8 + $0x2c] sm:$0xf]
    %v95 = vld [vmem:[#allocation8 + $0x30] sm:$0xf]
    %v96 = vld [vmem:[#allocation8 + $0x34] sm:$0xf]
    %v97 = vld [vmem:[#allocation8 + $0x38] sm:$0xf]
    %v98 = vld [vmem:[#allocation8 + $0x3c] sm:$0xf]
    %v99 = vld [vmem:[%s3] sm:$0x1]
    %v101 = vlaneseq
    %v102 = vshrl.u32 %v101, 7
    %v103 = vsub.s32 0, %v102
    %v104 = vrot.slane %v99, %v103
    %v122 = vunpack.c.l.b16 %v83
    %v123 = vunpack.c.l.b16 %v84
    %v124 = vunpack.c.l.b16 %v85
    %v125 = vunpack.c.l.b16 %v86
    %v126 = vunpack.c.l.b16 %v87
    %v127 = vunpack.c.l.b16 %v88
    %v128 = vunpack.c.l.b16 %v89
    %v129 = vunpack.c.l.b16 %v90
    %v130 = vunpack.c.l.b16 %v91
    %v131 = vunpack.c.l.b16 %v92
    %v132 = vunpack.c.l.b16 %v93
    %v133 = vunpack.c.l.b16 %v94
    %v134 = vunpack.c.l.b16 %v95
    %v135 = vunpack.c.l.b16 %v96
    %v136 = vunpack.c.l.b16 %v97
    %v137 = vunpack.c.l.b16 %v98
    %v138 = vpack.c.b16 %v123, %v122
    %v139 = vpack.c.b16 %v125, %v124
    %v140 = vpack.c.b16 %v127, %v126
    %v141 = vpack.c.b16 %v129, %v128
    %v142 = vpack.c.b16 %v131, %v130
    %v143 = vpack.c.b16 %v133, %v132
    %v144 = vpack.c.b16 %v135, %v134
    %v145 = vpack.c.b16 %v137, %v136
    %154 = vmatprep.subr.bf16.mxu0 0
    %155 = vmatpush1.bf16.msra.mxu0 %v138
    %156 = vmatprep.subr.bf16.mxu0 0
    %157 = vmatpush1.bf16.msra.mxu0 %v139
    %158 = vmatprep.subr.bf16.mxu0 0
    %159 = vmatpush1.bf16.msra.mxu0 %v140
    %160 = vmatprep.subr.bf16.mxu0 0
    %161 = vmatpush1.bf16.msra.mxu0 %v141
    %162 = vmatprep.subr.bf16.mxu0 0
    %163 = vmatpush1.bf16.msra.mxu0 %v142
    %164 = vmatprep.subr.bf16.mxu0 0
    %165 = vmatpush1.bf16.msra.mxu0 %v143
    %166 = vmatprep.subr.bf16.mxu0 0
    %167 = vmatpush1.bf16.msra.mxu0 %v144
    %168 = vmatprep.subr.bf16.mxu0 0
    %169 = vmatpush1.bf16.msra.mxu0 %v145
    %170 = vmatprep.subr.bf16.mxu0 0
    %171 = vmatpush1.bf16.msra.mxu0 0
    %172 = vmatprep.subr.bf16.mxu0 0
    %173 = vmatpush1.bf16.msra.mxu0 0
    %174 = vmatprep.subr.bf16.mxu0 0
    %175 = vmatpush1.bf16.msra.mxu0 0
    %176 = vmatprep.subr.bf16.mxu0 0
    %177 = vmatpush1.bf16.msra.mxu0 0
    %178 = vmatprep.subr.bf16.mxu0 0
    %179 = vmatpush1.bf16.msra.mxu0 0
    %180 = vmatprep.subr.bf16.mxu0 0
    %181 = vmatpush1.bf16.msra.mxu0 0
    %182 = vmatprep.subr.bf16.mxu0 0
    %183 = vmatpush1.bf16.msra.mxu0 0
    %184 = vmatprep.subr.bf16.mxu0 0
    %185 = vmatpush1.bf16.msra.mxu0 0
    %186 = vmatprep.mubr.bf16.mxu0 0
    %187 = vmatmul.mubr.bf16.gmra.mrb[0].mxu0 %v82
    %v188 = vpop.f32.mrb[0].mxu0
    %v189 = vadd.f32 %v104, %v188
    %v190 = vpop.f32.mrb[0].mxu0
    %v191 = vpop.f32.mrb[0].mxu0
    %v192 = vpop.f32.mrb[0].mxu0
    %193 = vdwg.mxu0
    %v194 = vmul.f32 %v189, 0.5
    %v195 = vmul.f32 %v189, 0.70710677
    %v196 = verf.f32.pop %v195
    %v197 = vadd.f32 %v196, 1.0
    %v198 = vmul.f32 %v194, %v197
    %v199 = vld [vmem:[%s4] sm:$0x1]
    %v201 = vlaneseq
    %v202 = vshrl.u32 %v201, 7
    %v203 = vsub.s32 0, %v202
    %v204 = vrot.slane %v199, %v203
    %v206 = vmul.f32 %v198, %v204
    %v207 = vld [vmem:[%s5] sm:$0x1]
    %v209 = vlaneseq
    %v210 = vshrl.u32 %v209, 7
    %v211 = vsub.s32 0, %v210
    %v212 = vrot.slane %v207, %v211
    %v214 = vadd.f32 %v206, %v212
    %s215 = sld [smem:[#allocation6]]
    %v216 = vstv %s215
    %v217 = vmul.f32 %v81, %v216
    %s218 = sld [smem:[#allocation7]]
    %v219 = vstv %s218
    %v220 = vadd.f32 %v217, %v219
    %v221 = vtanh.pop %v220
    %v222 = vlaneseq
    %v223 = vand.u32 %v222, 127
    %vm224 = vcmp.eq.s32.totalorder %v223, 16
    %226 = vset.pattern.permute.xlu0 32
    %227 = vperm.xlu0 %226, %v221
    %v228 = vpop.permute.xlu0 %227
    %v230 = vsel %vm224, %v228, %v214
    %231 = vst [vmem:[#allocation11] sm:$0xff] %v230
    // Predicated region
    $region48: #{tpu_custom_call.1} parent=1 // pred_check
      _
    $region49: #{tpu_custom_call.1} parent=1 // pred_check_branch
      %233 = sbr.rel (0) target = $region51
    $region50: #{tpu_custom_call.1} parent=1 // pred_region
      %s235 = ssub.s32 128, 128
      %236 = vsyncadd [#allocation10], %s235
      %s238 = sshll.u32 [#allocation11], 4
      %s239 = int_to_ptr.vmem [resolvable:$true] %s238
      %241 = dma.vmem_to_hbm [thread:$0]  %s239, 128, %s8, [#allocation10]
    $region51: #{tpu_custom_call.1} parent=1 // pred_fallthru
      _
    // Predicated region
    $region52: #{tpu_custom_call.1} parent=1 // pred_check
      _
    $region53: #{tpu_custom_call.1} parent=1 // pred_check_branch
      %243 = sbr.rel (0) target = $region55
    $region54: #{tpu_custom_call.1} parent=1 // pred_region
      %244 = dma.done [#allocation10], 128
    $region55: #{tpu_custom_call.1} parent=1 // pred_fallthru
      _
    %245 = vsyncpa [#allocation9], 1
    %246 = vsyncpa [#allocation10], 1
  %247 = vsyncmov [#allocation3]
  %s248 = vpop.sfrf %247
  %p249 = scmp.eq.s32.totalorder %s248, 0
  %p250 = pneg %p249
  %252 = shalt.err (%p250)

</llo_original>
